<compile_context>
chip_gen: v7x
topology: tpu7x:2x2x1
jax: 0.10.0
libtpu: 0.0.40
codegen_flags: <defaults>
</compile_context>

<pallas_src>
import functools

import jax
import jax.numpy as jnp
from jax.experimental import pallas as pl
from jax.experimental.pallas import tpu as pltpu


def conv1x1_sigmoid_kernel(coef_ref, x_ref, o_ref, *, shift):
    # coef_ref: VMEM [4, R, 1]
    #   coef[0]: weight applied to the row's own channel
    #   coef[1]: weight applied to rows +shift (other channel, only on co=0 rows)
    #   coef[2]: weight applied to rows -shift (other channel, only on co=1 rows)
    #   coef[3]: bias per row
    # x_ref:    VMEM [R, 128]  (rows ordered (n, channel, 128-lane chunk))
    # o_ref:    VMEM [R, 128]  (rows ordered (n, out_channel, 128-lane chunk))
    x = x_ref[...]
    a = coef_ref[0]                       # [R, 1]
    b = coef_ref[1]                       # [R, 1]
    c = coef_ref[2]                       # [R, 1]
    d = coef_ref[3]                       # [R, 1]

    r = x.shape[0]
    x_up = pltpu.roll(x, shift=(r - shift) % r, axis=0)   # row i -> x[i + shift]
    x_dn = pltpu.roll(x, shift=shift, axis=0)             # row i -> x[i - shift]

    y = a * x + b * x_up + c * x_dn + d                   # 1x1 conv, full vregs
    # sigmoid(y) = 1 / (1 + exp(-y)); exp + approx reciprocal both go to the EUP.
    o_ref[...] = pl.reciprocal(1.0 + jnp.exp(-y), approx=True).astype(o_ref.dtype)


def conv1x1_pad1_sigmoid(x_nchw, weight, bias):
    """Equivalent of torch.nn.Conv2d(2, 2, 1, stride=1, padding=1) + sigmoid.

    x_nchw: [N, 2, H, W] float32
    weight: [2, 2, 1, 1]
    bias:   [2]
    returns [N, 2, H+2, W+2]
    """
    N, Cin, H, W = x_nchw.shape
    Cout = weight.shape[0]
    assert Cin == 2 and Cout == 2, "kernel is specialized to the module's 2->2 conv"
    HW = H * W
    assert HW % 128 == 0, "H*W must be a multiple of 128 for the lane-dense packing"

    L = HW // 128            # 128-lane chunks per (batch, channel)
    R = N * Cin * L          # sublane rows; 8 for the demo shape -> one full vreg

    w = weight.reshape(Cout, Cin).astype(jnp.float32)

    # Per-sublane coefficient vectors (row order: n, channel, lane-chunk).
    co_row = (jnp.arange(R) // L) % 2
    is1 = co_row.astype(jnp.float32)
    is0 = 1.0 - is1
    coef = jnp.stack(
        [
            is0 * w[0, 0] + is1 * w[1, 1],   # own-channel weight
            is0 * w[0, 1],                   # +L neighbour weight (co=0 rows only)
            is1 * w[1, 0],                   # -L neighbour weight (co=1 rows only)
            is0 * bias[0] + is1 * bias[1],   # bias
        ],
        axis=0,
    ).reshape(4, R, 1)

    x_packed = x_nchw.reshape(R, 128)        # free contiguous reshape (stays NCHW)

    out_packed = pl.pallas_call(
        functools.partial(conv1x1_sigmoid_kernel, shift=L),
        out_shape=jax.ShapeDtypeStruct((R, 128), jnp.float32),
        in_specs=[
            pl.BlockSpec(memory_space=pltpu.MemorySpace.VMEM),   # coef
            pl.BlockSpec(memory_space=pltpu.MemorySpace.VMEM),   # x
        ],
        out_specs=pl.BlockSpec(memory_space=pltpu.MemorySpace.VMEM),
    )(coef, x_packed)

    # Zero-padded border of a 1x1 conv is exactly sigmoid(bias[c]).
    Hp, Wp = H + 2, W + 2
    border = jax.nn.sigmoid(bias)
    out = jnp.broadcast_to(border[None, :, None, None], (N, Cout, Hp, Wp))
    out = jax.lax.dynamic_update_slice(
        out, out_packed.reshape(N, Cout, H, W), (0, 0, 1, 1))
    return out


if __name__ == "__main__":
    key = jax.random.PRNGKey(0)
    k_x, k_w, k_b = jax.random.split(key, 3)

    # Shapes consistent with the module definition (Cin = Cout = 2).
    N, Cin, Cout, H, W = 2, 2, 2, 16, 16

    x = jax.random.normal(k_x, (N, Cin, H, W), dtype=jnp.float32)
    fan_in = Cin * 1 * 1
    bound = 1.0 / (fan_in ** 0.5)
    weight = jax.random.uniform(k_w, (Cout, Cin, 1, 1), jnp.float32, -bound, bound)
    bias = jax.random.uniform(k_b, (Cout,), jnp.float32, -bound, bound)

    fn = jax.jit(conv1x1_pad1_sigmoid)
    out = jax.block_until_ready(fn(x, weight, bias))

    # Reference in plain JAX (1x1 conv == channel matmul on the padded input).
    x_pad = jnp.pad(x, ((0, 0), (0, 0), (1, 1), (1, 1)))
    ref = jnp.einsum("nchw,oc->nohw", x_pad, weight.reshape(Cout, Cin))
    ref = ref + bias[None, :, None, None]
    ref = jax.nn.sigmoid(ref)

    assert out.shape == (N, Cout, H + 2, W + 2)
    # approx=True reciprocal (EUP) has ~1e-3 relative error budget.
    assert jnp.allclose(out, ref, atol=2e-3, rtol=2e-3), float(
        jnp.max(jnp.abs(out - ref)))

    print("KERNEL_OK")
</pallas_src>

<mosaic_0001>
module attributes {stable_mosaic.version = 11 : i64} {
  func.func @conv1x1_sigmoid_kernel(%arg0: memref<4x8x1xf32, #tpu.memory_space<vmem>>, %arg1: memref<8x128xf32, #tpu.memory_space<vmem>>, %arg2: memref<8x128xf32, #tpu.memory_space<vmem>>) attributes {dimension_semantics = [], scalar_prefetch = 0 : i64, scratch_operands = 0 : i64, tpu.core_type = #tpu.core_type<tc>} {
    %c0 = arith.constant 0 : index
    %c0_0 = arith.constant 0 : index
    %0 = vector.load %arg1[%c0, %c0_0] : memref<8x128xf32, #tpu.memory_space<vmem>>, vector<8x128xf32>
    %c0_1 = arith.constant 0 : index
    %c0_2 = arith.constant 0 : index
    %c0_3 = arith.constant 0 : index
    %1 = vector.load %arg0[%c0_1, %c0_2, %c0_3] : memref<4x8x1xf32, #tpu.memory_space<vmem>>, vector<1x8x1xf32>
    %2 = vector.shape_cast %1 : vector<1x8x1xf32> to vector<8x1xf32>
    %c1 = arith.constant 1 : index
    %c0_4 = arith.constant 0 : index
    %c0_5 = arith.constant 0 : index
    %3 = vector.load %arg0[%c1, %c0_4, %c0_5] : memref<4x8x1xf32, #tpu.memory_space<vmem>>, vector<1x8x1xf32>
    %4 = vector.shape_cast %3 : vector<1x8x1xf32> to vector<8x1xf32>
    %c2 = arith.constant 2 : index
    %c0_6 = arith.constant 0 : index
    %c0_7 = arith.constant 0 : index
    %5 = vector.load %arg0[%c2, %c0_6, %c0_7] : memref<4x8x1xf32, #tpu.memory_space<vmem>>, vector<1x8x1xf32>
    %6 = vector.shape_cast %5 : vector<1x8x1xf32> to vector<8x1xf32>
    %c3 = arith.constant 3 : index
    %c0_8 = arith.constant 0 : index
    %c0_9 = arith.constant 0 : index
    %7 = vector.load %arg0[%c3, %c0_8, %c0_9] : memref<4x8x1xf32, #tpu.memory_space<vmem>>, vector<1x8x1xf32>
    %8 = vector.shape_cast %7 : vector<1x8x1xf32> to vector<8x1xf32>
    %c6_i32 = arith.constant 6 : i32
    %9 = tpu.dynamic_rotate %0 by %c6_i32 dim 0 : vector<8x128xf32>, i32 -> vector<8x128xf32>
    %c2_i32 = arith.constant 2 : i32
    %10 = tpu.dynamic_rotate %0 by %c2_i32 dim 0 : vector<8x128xf32>, i32 -> vector<8x128xf32>
    %11 = vector.broadcast %2 : vector<8x1xf32> to vector<8x128xf32>
    %12 = arith.mulf %11, %0 : vector<8x128xf32>
    %13 = vector.broadcast %4 : vector<8x1xf32> to vector<8x128xf32>
    %14 = arith.mulf %13, %9 : vector<8x128xf32>
    %15 = arith.addf %12, %14 : vector<8x128xf32>
    %16 = vector.broadcast %6 : vector<8x1xf32> to vector<8x128xf32>
    %17 = arith.mulf %16, %10 : vector<8x128xf32>
    %18 = arith.addf %15, %17 : vector<8x128xf32>
    %19 = vector.broadcast %8 : vector<8x1xf32> to vector<8x128xf32>
    %20 = arith.addf %18, %19 : vector<8x128xf32>
    %cst = arith.constant 0.000000e+00 : f32
    %21 = vector.broadcast %cst : f32 to vector<8x128xf32>
    %22 = arith.subf %21, %20 : vector<8x128xf32>
    %23 = math.exp %22 : vector<8x128xf32>
    %cst_10 = arith.constant 1.000000e+00 : f32
    %24 = vector.broadcast %cst_10 : f32 to vector<8x128xf32>
    %25 = arith.addf %24, %23 : vector<8x128xf32>
    %26 = tpu.reciprocal %25 {approx = true} : vector<8x128xf32> -> vector<8x128xf32>
    %c0_11 = arith.constant 0 : index
    %c0_12 = arith.constant 0 : index
    %27 = vector.load %arg2[%c0_11, %c0_12] : memref<8x128xf32, #tpu.memory_space<vmem>>, vector<8x128xf32>
    tpu.vector_store %arg2[%c0_11, %c0_12], %26 {strides = array<i32>} : memref<8x128xf32, #tpu.memory_space<vmem>>, vector<8x128xf32>,
    return
  }
}

</mosaic_0001>

<llo_original>
// kernel: conv1x1_pad1_sigmoid.1
$region0: #{conv1x1_pad1_sigmoid.1}
  #allocation0 [shape = 'u32[]', space=smem, size = 0x4, offset = 0x4, fixed_abs, tag = 'smem constant byte address 0x4 - core index']
  #allocation1 [shape = 'u32[144,128]{1,0:T(1,128)}', space=vmem, size = 0x12000, scoped, tag = 'internal scratch']
  %s0 = inlined_call_operand.vmem [shape: f32[4,8,1], index: 0, kind: input, shape index: {}]
  %s1 = inlined_call_operand.vmem [shape: f32[8,128], index: 1, kind: input, shape index: {}]
  %s2 = inlined_call_operand.vmem [shape: f32[8,128], index: 2, kind: output, shape index: {}]
  %s3 = sld [smem:[#allocation0]]
  $region18: #{conv1x1_pad1_sigmoid.1} parent=0
    _
  %s5 = ssub.s32 1, %s3
  %s6 = scalar_select 0, %s5, %s3
  // Predicated region
  $region2: #{conv1x1_pad1_sigmoid.1} parent=0 // pred_check
    _
  $region3: #{conv1x1_pad1_sigmoid.1} parent=0 // pred_check_branch
    %8 = sbr.rel (0) target = $region5
  $region4: #{conv1x1_pad1_sigmoid.1} parent=0 // pred_region
    _
  $region5: #{conv1x1_pad1_sigmoid.1} parent=0 // pred_fallthru
    _
  // Predicated region
  $region6: #{conv1x1_pad1_sigmoid.1} parent=0 // pred_check
    _
  $region7: #{conv1x1_pad1_sigmoid.1} parent=0 // pred_check_branch
    %10 = sbr.rel (0) target = $region9
  $region8: #{conv1x1_pad1_sigmoid.1} parent=0 // pred_region
    _
  $region9: #{conv1x1_pad1_sigmoid.1} parent=0 // pred_fallthru
    _
  %v11 = vld [vmem:[%s1] sm:$0xff]
  %v12 = vld [vmem:[%s0] sm:$0xff]
  %s13 = scalar_lea.vmem %s0, 8
  %v14 = vld [vmem:[%s13] sm:$0xff]
  %s15 = scalar_lea.vmem %s0, 16
  %v16 = vld [vmem:[%s15] sm:$0xff]
  %s17 = scalar_lea.vmem %s0, 24
  %v18 = vld [vmem:[%s17] sm:$0xff]
  %v19 = vrot.slane %v11, 2
  %v20 = vrot.slane %v11, 6
  %22 = vset.pattern.permute.xlu0 0
  %23 = vperm.xlu0 %22, %v12
  %v24 = vpop.permute.xlu0 %23
  %v26 = vmul.f32 %v24, %v11
  %28 = vset.pattern.permute.xlu0 0
  %29 = vperm.xlu0 %28, %v14
  %v30 = vpop.permute.xlu0 %29
  %v32 = vmul.f32 %v30, %v19
  %v33 = vadd.f32 %v26, %v32
  %35 = vset.pattern.permute.xlu0 0
  %36 = vperm.xlu0 %35, %v16
  %v37 = vpop.permute.xlu0 %36
  %v39 = vmul.f32 %v37, %v20
  %v40 = vadd.f32 %v33, %v39
  %42 = vset.pattern.permute.xlu0 0
  %43 = vperm.xlu0 %42, %v18
  %v44 = vpop.permute.xlu0 %43
  %v46 = vadd.f32 %v40, %v44
  %v47 = vsub.f32 0.0, %v46
  %v48 = vmul.f32 %v47, 1.442695
  %v49 = vpow.pop %v48
  %v50 = vadd.f32 %v49, 1.0
  %v51 = vrcp.pop %v50
  %52 = vst [vmem:[%s2] sm:$0xff] %v51
  // Predicated region
  $region10: #{conv1x1_pad1_sigmoid.1} parent=0 // pred_check
    _
  $region11: #{conv1x1_pad1_sigmoid.1} parent=0 // pred_check_branch
    %54 = sbr.rel (0) target = $region13
  $region12: #{conv1x1_pad1_sigmoid.1} parent=0 // pred_region
    _
  $region13: #{conv1x1_pad1_sigmoid.1} parent=0 // pred_fallthru
    _
  // Predicated region
  $region14: #{conv1x1_pad1_sigmoid.1} parent=0 // pred_check
    _
  $region15: #{conv1x1_pad1_sigmoid.1} parent=0 // pred_check_branch
    %56 = sbr.rel (0) target = $region17
  $region16: #{conv1x1_pad1_sigmoid.1} parent=0 // pred_region
    _
  $region17: #{conv1x1_pad1_sigmoid.1} parent=0 // pred_fallthru
    _

</llo_original>
